<compile_context>
chip_gen: v6e
topology: v6e:2x2x1
jax: 0.10.0
libtpu: 0.0.40
codegen_flags: <defaults>
</compile_context>

<pallas_src>
import functools
import math

import jax
import jax.numpy as jnp
from jax.experimental import pallas as pl
from jax.experimental.pallas import tpu as pltpu

_LANE = 128
_SUBLANE = 8
_TARGET_BLOCK_BYTES = 10 * 1024 * 1024   # x + out + pe bytes per grid step
_VMEM_HEADROOM = 2 * 1024 * 1024


def _make_positional_encoding(max_len: int, emb_dim: int, dtype=jnp.float32):
    """Deterministic sin/cos table, identical to the PyTorch __init__."""
    assert emb_dim % 2 == 0, "emb_dim must be even for the sin/cos interleave"
    position = jnp.arange(max_len, dtype=jnp.float32)[:, None]                  # [max_len, 1]
    div_term = jnp.exp(
        jnp.arange(0, emb_dim, 2, dtype=jnp.float32) * (-math.log(10000.0) / emb_dim)
    )                                                                            # [emb_dim//2]
    angles = position * div_term                                                 # [max_len, emb_dim//2]
    pe = jnp.zeros((max_len, emb_dim), dtype=jnp.float32)
    pe = pe.at[:, 0::2].set(jnp.sin(angles))
    pe = pe.at[:, 1::2].set(jnp.cos(angles))
    return pe.astype(dtype)                                                      # [max_len, emb_dim]


def _round_up(v: int, m: int) -> int:
    return ((v + m - 1) // m) * m


def _choose_tile_rows(num_rows: int, bytes_per_row: int, target_bytes: int) -> int:
    """Rows per block: ~target bytes, multiple of 8 sublanes (or full extent)."""
    rows = max(1, int(target_bytes // max(bytes_per_row, 1)))
    if rows >= num_rows:
        # Whole extent fits; split in two (still 8-aligned) if that is cheap so
        # the "parallel" seq axis has >=2 steps to shard across v7x's two TCs.
        if num_rows % (2 * _SUBLANE) == 0 and num_rows * bytes_per_row > (2 << 20):
            return num_rows // 2
        return num_rows
    return max(_SUBLANE, (rows // _SUBLANE) * _SUBLANE)


def _vmem_limit(block_bytes_per_step: int) -> int:
    need = 2 * block_bytes_per_step + _VMEM_HEADROOM      # double-buffered streams
    return int(min(max(need, 16 * 1024 * 1024), 96 * 1024 * 1024))


# --------------------------- kernels ---------------------------------------

def _pe_add_bcast3d_kernel(x_ref, pe_ref, o_ref):
    # x: [tS, B, tE], pe: [tS, 1, tE] -> batch broadcast happens in the VPU add.
    o_ref[...] = (x_ref[...] + pe_ref[...]).astype(o_ref.dtype)


def _pe_add_grouped_kernel(col_groups, x_ref, pe_ref, o_ref):
    # x/o: [tS, B*E] (lane/sublane dense), pe: [tS, G*E].  Batch broadcast via
    # static column-group slices; VPU/vst headroom makes this free under the
    # HBM-DMA bottleneck, and pe HBM traffic stays ~1/B of x.
    pe_w = pe_ref[...]
    for c0, w in col_groups:               # static Python unroll (<= ~32 groups)
        o_ref[:, c0:c0 + w] = (x_ref[:, c0:c0 + w] + pe_w[:, :w]).astype(o_ref.dtype)


# --------------------------- wrapper ----------------------------------------

def positional_encoding_forward(x: jax.Array, pe_table: jax.Array, *,
                                donate_x: bool = False) -> jax.Array:
    """x: [seq, batch, emb]; pe_table: [max_len, emb]. Returns x + pe[:seq]."""
    S, B, E = x.shape
    if S > pe_table.shape[0]:
        raise ValueError(f"seq_len {S} exceeds max_len {pe_table.shape[0]}")

    pe = pe_table[:S]                                          # tiny one-time slice
    out_dtype = jnp.result_type(x.dtype, pe.dtype)             # torch-style promotion
    ix = jnp.dtype(x.dtype).itemsize
    io = jnp.dtype(out_dtype).itemsize
    ip = jnp.dtype(pe.dtype).itemsize

    cost = pl.CostEstimate(flops=S * B * E, transcendentals=0,
                           bytes_accessed=S * B * E * (ix + io) + S * E * ip)
    # Only declare aliasing when the caller guarantees donation (and dtypes match);
    # otherwise XLA would insert a defensive full copy of x.
    alias = {0: 0} if (donate_x and out_dtype == x.dtype) else {}

    # ---------- 3-D sublane/lane-dense path (E % 128 == 0, B % 8 == 0) ----------
    if E % _LANE == 0 and B % _SUBLANE == 0:
        pe3 = pe[:, None, :]                                   # [S, 1, E]
        # Wide-row guard: tile E too if a minimal 8-row block would be too big.
        per_e_col_bytes = _SUBLANE * (B * (ix + io) + ip)      # bytes/E-column @ 8 seq rows
        tE = E
        if per_e_col_bytes * E > _TARGET_BLOCK_BYTES:
            tE = max(_LANE, (_TARGET_BLOCK_BYTES // (per_e_col_bytes * _LANE)) * _LANE)
        row_bytes = B * tE * (ix + io) + tE * ip               # no padding: B%8==0, tE%128==0
        tS = _choose_tile_rows(S, row_bytes, _TARGET_BLOCK_BYTES)
        grid = (pl.cdiv(S, tS), pl.cdiv(E, tE))
        cp = pltpu.CompilerParams(dimension_semantics=("parallel", "parallel"),
                                  vmem_limit_bytes=_vmem_limit(tS * row_bytes))
        return pl.pallas_call(
            _pe_add_bcast3d_kernel,
            out_shape=jax.ShapeDtypeStruct((S, B, E), out_dtype),
            grid_spec=pl.GridSpec(
                grid=grid,
                in_specs=[pl.BlockSpec((tS, B, tE), lambda s, e: (s, 0, e)),
                          pl.BlockSpec((tS, 1, tE), lambda s, e: (s, 0, e))],
                out_specs=pl.BlockSpec((tS, B, tE), lambda s, e: (s, 0, e)),
            ),
            compiler_params=cp,
            cost_estimate=cost,
            input_output_aliases=alias,
        )(x, pe3)

    # ---------- flattened lane-dense path: x -> [S, B*E] -----------------------
    # Free contiguous reshape; no x-sized pe broadcast in HBM.  pe is tiled in
    # the wrapper only to a small group width G*E (>= 128 lanes, and G >= B/32
    # so the in-kernel unroll stays <= ~32 slices); extra pe bytes <= ~3% of x.
    x2 = x.reshape(S, B * E)
    G = min(B, max(-(-_LANE // E), -(-B // 32)))
    pe_wide = jnp.tile(pe, (1, G))                             # [S, G*E], tiny
    col_groups, c0 = [], 0
    while c0 < B * E:
        w = min(G * E, B * E - c0)
        col_groups.append((c0, w))
        c0 += w

    row_bytes = (_round_up(B * E, _LANE) * (ix + io) + _round_up(G * E, _LANE) * ip)
    tS = _choose_tile_rows(S, row_bytes, _TARGET_BLOCK_BYTES)
    # TODO(synk): if even an 8-row block exceeds the VMEM budget (huge B*E),
    # add a column grid axis over batch groups instead of only raising the limit.
    grid = (pl.cdiv(S, tS),)
    cp = pltpu.CompilerParams(dimension_semantics=("parallel",),
                              vmem_limit_bytes=_vmem_limit(tS * row_bytes))
    kernel = functools.partial(_pe_add_grouped_kernel, tuple(col_groups))
    out2 = pl.pallas_call(
        kernel,
        out_shape=jax.ShapeDtypeStruct((S, B * E), out_dtype),
        grid_spec=pl.GridSpec(
            grid=grid,
            in_specs=[pl.BlockSpec((tS, B * E), lambda s: (s, 0)),
                      pl.BlockSpec((tS, G * E), lambda s: (s, 0))],
            out_specs=pl.BlockSpec((tS, B * E), lambda s: (s, 0)),
        ),
        compiler_params=cp,
        cost_estimate=cost,
        input_output_aliases=alias,
    )(x2, pe_wide)
    return out2.reshape(S, B, E)


if __name__ == "__main__":
    key = jax.random.PRNGKey(0)
    k1, k2, k3 = jax.random.split(key, 3)
    max_len, seq_len = 80, 8

    def ref_forward(x, pe_table):
        return x + pe_table[: x.shape[0]][:, None, :]

    # Case 1: module defaults (emb_dim=32, batch=2) -> flattened grouped path.
    pe32 = _make_positional_encoding(max_len, 32, dtype=jnp.float32)
    x1 = jax.random.normal(k1, (seq_len, 2, 32), dtype=jnp.float32)
    o1 = jax.block_until_ready(positional_encoding_forward(x1, pe32))
    assert o1.shape == x1.shape and o1.dtype == jnp.float32
    assert jnp.allclose(o1, ref_forward(x1, pe32), atol=1e-6), "mismatch (E=32, B=2)"

    # Case 2: emb_dim=128, batch=2 (B % 8 != 0) -> flattened 128-aligned groups.
    pe128 = _make_positional_encoding(max_len, 128, dtype=jnp.float32)
    x2 = jax.random.normal(k2, (seq_len, 2, 128), dtype=jnp.float32)
    o2 = jax.block_until_ready(positional_encoding_forward(x2, pe128))
    assert o2.shape == x2.shape
    assert jnp.allclose(o2, ref_forward(x2, pe128), atol=1e-6), "mismatch (E=128, B=2)"

    # Case 3: emb_dim=128, batch=8 -> native 3-D sublane/lane-dense path.
    x3 = jax.random.normal(k3, (seq_len, 8, 128), dtype=jnp.float32)
    o3 = jax.block_until_ready(positional_encoding_forward(x3, pe128))
    assert o3.shape == x3.shape
    assert jnp.allclose(o3, ref_forward(x3, pe128), atol=1e-6), "mismatch (E=128, B=8)"

    print("KERNEL_OK")
</pallas_src>

<mosaic_0001>
module attributes {stable_mosaic.version = 11 : i64} {
  func.func @_pe_add_grouped_kernel(%arg0: i32, %arg1: memref<8x64xf32, #tpu.memory_space<vmem>>, %arg2: memref<8x64xf32, #tpu.memory_space<vmem>>, %arg3: memref<8x64xf32, #tpu.memory_space<vmem>>) attributes {dimension_semantics = [#tpu.dimension_semantics<parallel>], iteration_bounds = array<i64: 1>, scalar_prefetch = 0 : i64, scratch_operands = 0 : i64, tpu.core_type = #tpu.core_type<tc>, window_params = [{transform_indices = @transform_0, window_bounds = array<i64: 8, 64>}, {transform_indices = @transform_1, window_bounds = array<i64: 8, 64>}, {transform_indices = @transform_2, window_bounds = array<i64: 8, 64>}]} {
    %c0 = arith.constant 0 : index
    %c0_0 = arith.constant 0 : index
    %0 = vector.load %arg2[%c0, %c0_0] : memref<8x64xf32, #tpu.memory_space<vmem>>, vector<8x64xf32>
    %c0_1 = arith.constant 0 : index
    %c0_2 = arith.constant 0 : index
    %1 = vector.load %arg1[%c0_1, %c0_2] : memref<8x64xf32, #tpu.memory_space<vmem>>, vector<8x64xf32>
    %2 = arith.addf %1, %0 : vector<8x64xf32>
    %c0_3 = arith.constant 0 : index
    %c0_4 = arith.constant 0 : index
    %3 = vector.load %arg3[%c0_3, %c0_4] : memref<8x64xf32, #tpu.memory_space<vmem>>, vector<8x64xf32>
    tpu.vector_store %arg3[%c0_3, %c0_4], %2 {strides = array<i32>} : memref<8x64xf32, #tpu.memory_space<vmem>>, vector<8x64xf32>,
    return
  }
  func.func @transform_0(%arg0: i32) -> (i32, i32) {
    %c0_i32 = arith.constant 0 : i32
    %c0_i32_0 = arith.constant 0 : i32
    return %arg0, %c0_i32 : i32, i32
  }
  func.func @transform_1(%arg0: i32) -> (i32, i32) {
    %c0_i32 = arith.constant 0 : i32
    %c0_i32_0 = arith.constant 0 : i32
    return %arg0, %c0_i32 : i32, i32
  }
  func.func @transform_2(%arg0: i32) -> (i32, i32) {
    %c0_i32 = arith.constant 0 : i32
    %c0_i32_0 = arith.constant 0 : i32
    return %arg0, %c0_i32 : i32, i32
  }
}

</mosaic_0001>

<llo_original>
// kernel: tpu_custom_call.1
$region0: #{tpu_custom_call.1}
  #allocation0 [shape = 'u32[]', space=smem, size = 0x4, offset = 0x4, fixed_abs, tag = 'smem constant byte address 0x4 - core index']
  #allocation1 [shape = 'u32[144,128]{1,0:T(1,128)}', space=vmem, size = 0x12000, scoped, tag = 'internal scratch']
  %s0 = inlined_call_operand.hbm [shape: f32[8,64], index: 0, kind: input, shape index: {}]
  %s1 = inlined_call_operand.hbm [shape: f32[8,64], index: 1, kind: input, shape index: {}]
  %s2 = inlined_call_operand.hbm [shape: f32[8,64], index: 2, kind: output, shape index: {}]
  %s3 = sld [smem:[#allocation0]]
  $region26: #{tpu_custom_call.1} parent=0
    _
  %s5 = ssub.s32 1, %s3
  %s6 = scalar_select 0, %s5, %s3
  $region1: #{tpu_custom_call.1} parent=0
    #allocation2 [shape = 'u8[4096]{0}', space=vmem, size = 0x1000, scoped, tag = 'input window, operand 0, single buffered']
    #allocation3 [shape = 's32[1]{0}', space=sflag, size = 0x4, scoped, tag = 'scoped memory for tpu_custom_call.1']
    #allocation4 [shape = 's32[1]{0}', space=sflag, size = 0x4, scoped, tag = 'scoped memory for tpu_custom_call.1']
    #allocation5 [shape = 'u8[4096]{0}', space=vmem, size = 0x1000, scoped, tag = 'input window, operand 1, single buffered']
    #allocation6 [shape = 's32[1]{0}', space=sflag, size = 0x4, scoped, tag = 'scoped memory for tpu_custom_call.1']
    #allocation7 [shape = 'u8[4096]{0}', space=vmem, size = 0x1000, scoped, tag = 'output window, operand 0, single buffered']
    %7 = vsyncpa [#allocation3], 0
    %8 = vsyncpa [#allocation6], 0
    %9 = vsyncpa [#allocation4], 0
    // Predicated region
    $region2: #{tpu_custom_call.1} parent=1 // pred_check
      _
    $region3: #{tpu_custom_call.1} parent=1 // pred_check_branch
      %11 = sbr.rel (0) target = $region5
    $region4: #{tpu_custom_call.1} parent=1 // pred_region
      %s13 = ssub.s32 128, 128
      %14 = vsyncadd [#allocation3], %s13
      %s16 = sshll.u32 [#allocation2], 4
      %s17 = int_to_ptr.vmem [resolvable:$true] %s16
      %19 = dma.hbm_to_vmem [thread:$0]  %s0, 128, %s17, [#allocation3]
    $region5: #{tpu_custom_call.1} parent=1 // pred_fallthru
      _
    // Predicated region
    $region6: #{tpu_custom_call.1} parent=1 // pred_check
      _
    $region7: #{tpu_custom_call.1} parent=1 // pred_check_branch
      %21 = sbr.rel (0) target = $region9
    $region8: #{tpu_custom_call.1} parent=1 // pred_region
      %s23 = ssub.s32 128, 128
      %24 = vsyncadd [#allocation6], %s23
      %s26 = sshll.u32 [#allocation5], 4
      %s27 = int_to_ptr.vmem [resolvable:$true] %s26
      %29 = dma.hbm_to_vmem [thread:$0]  %s1, 128, %s27, [#allocation6]
    $region9: #{tpu_custom_call.1} parent=1 // pred_fallthru
      _
    // Predicated region
    $region10: #{tpu_custom_call.1} parent=1 // pred_check
      _
    $region11: #{tpu_custom_call.1} parent=1 // pred_check_branch
      %31 = sbr.rel (0) target = $region13
    $region12: #{tpu_custom_call.1} parent=1 // pred_region
      %32 = dma.done [#allocation3], 128
    $region13: #{tpu_custom_call.1} parent=1 // pred_fallthru
      _
    // Predicated region
    $region14: #{tpu_custom_call.1} parent=1 // pred_check
      _
    $region15: #{tpu_custom_call.1} parent=1 // pred_check_branch
      %34 = sbr.rel (0) target = $region17
    $region16: #{tpu_custom_call.1} parent=1 // pred_region
      %35 = dma.done [#allocation6], 128
    $region17: #{tpu_custom_call.1} parent=1 // pred_fallthru
      _
    %v36 = vld [vmem:[#allocation5] sm:$0xff]
    %v37 = vld [vmem:[#allocation2] sm:$0xff]
    %v38 = vadd.f32 %v37, %v36
    %vm39 = vcmask 523264
    %40 = vst.msk [vmem:[#allocation7] sm:$0xff] %vm39, %v38
    // Predicated region
    $region18: #{tpu_custom_call.1} parent=1 // pred_check
      _
    $region19: #{tpu_custom_call.1} parent=1 // pred_check_branch
      %42 = sbr.rel (0) target = $region21
    $region20: #{tpu_custom_call.1} parent=1 // pred_region
      %s44 = ssub.s32 128, 128
      %45 = vsyncadd [#allocation4], %s44
      %s47 = sshll.u32 [#allocation7], 4
      %s48 = int_to_ptr.vmem [resolvable:$true] %s47
      %50 = dma.vmem_to_hbm [thread:$0]  %s48, 128, %s2, [#allocation4]
    $region21: #{tpu_custom_call.1} parent=1 // pred_fallthru
      _
    // Predicated region
    $region22: #{tpu_custom_call.1} parent=1 // pred_check
      _
    $region23: #{tpu_custom_call.1} parent=1 // pred_check_branch
      %52 = sbr.rel (0) target = $region25
    $region24: #{tpu_custom_call.1} parent=1 // pred_region
      %53 = dma.done [#allocation4], 128
    $region25: #{tpu_custom_call.1} parent=1 // pred_fallthru
      _
    %54 = vsyncpa [#allocation3], 1
    %55 = vsyncpa [#allocation6], 1
    %56 = vsyncpa [#allocation4], 1

</llo_original>
